<compile_context>
chip_gen: v5e
topology: v5e:2x2
jax: 0.10.0
libtpu: 0.0.40
codegen_flags: <defaults>
</compile_context>

<pallas_src>
from functools import partial

import jax
import jax.numpy as jnp
from jax import lax
from jax.experimental import pallas as pl
from jax.experimental.pallas import tpu as pltpu


# ---------------------------------------------------------------------------
# Helpers
# ---------------------------------------------------------------------------
def _pick_tile(size, candidates):
    for c in candidates:
        if size >= c and size % c == 0:
            return c
    return size


# ---------------------------------------------------------------------------
# Kernel 1: tiled fused linear layer  y = x @ W + b
# ---------------------------------------------------------------------------
def _linear_kernel(x_ref, w_ref, b_ref, o_ref, acc_ref, *, compute_dtype):
    k = pl.program_id(2)

    @pl.when(k == 0)
    def _():
        acc_ref[...] = jnp.zeros_like(acc_ref)

    acc_ref[...] += jnp.dot(
        x_ref[...].astype(compute_dtype),
        w_ref[...].astype(compute_dtype),
        preferred_element_type=jnp.float32,
    )

    @pl.when(k == pl.num_programs(2) - 1)
    def _():
        o_ref[...] = (acc_ref[...] + b_ref[...].astype(jnp.float32)).astype(o_ref.dtype)


def linear(x2d, w, b, *, compute_dtype, out_dtype):
    M, K = x2d.shape
    K2, N = w.shape
    assert K == K2

    # --- Row tiling: pad M so the row tile stays large and 8-aligned for any
    # sequence length (e.g. ViT T=197), instead of silently using a full-M tile.
    if M <= 512:
        m_pad = ((M + 7) // 8) * 8
        tm = m_pad
    else:
        m_pad = ((M + 255) // 256) * 256
        tm = 512 if m_pad % 512 == 0 else 256
    if m_pad != M:
        x2d = jnp.pad(x2d, ((0, m_pad - M), (0, 0)))

    # --- K tiling: keep the full K when it fits so the K grid axis collapses
    # and each weight tile is DMA'd once per (i, j) instead of once per step.
    tk = K if K <= 1024 else _pick_tile(K, (1024, 512, 256, 128))
    tn = _pick_tile(N, (256, 128))

    cost = pl.CostEstimate(
        flops=2 * M * N * K,
        transcendentals=0,
        bytes_accessed=(M * K) * x2d.dtype.itemsize
        + (K * N) * w.dtype.itemsize
        + (M * N) * jnp.dtype(out_dtype).itemsize
        + N * 4,
    )

    out = pl.pallas_call(
        partial(_linear_kernel, compute_dtype=compute_dtype),
        out_shape=jax.ShapeDtypeStruct((m_pad, N), out_dtype),
        grid_spec=pltpu.PrefetchScalarGridSpec(
            num_scalar_prefetch=0,
            grid=(m_pad // tm, N // tn, K // tk),
            in_specs=[
                pl.BlockSpec((tm, tk), lambda i, j, k: (i, k)),
                pl.BlockSpec((tk, tn), lambda i, j, k: (k, j)),
                pl.BlockSpec((1, tn), lambda i, j, k: (0, j)),
            ],
            out_specs=pl.BlockSpec((tm, tn), lambda i, j, k: (i, j)),
            scratch_shapes=[pltpu.VMEM((tm, tn), jnp.float32)],
        ),
        compiler_params=pltpu.CompilerParams(
            dimension_semantics=("parallel", "parallel", "arbitrary"),
        ),
        cost_estimate=cost,
    )(x2d, w, b.reshape(1, N))

    return out[:M] if m_pad != M else out


# ---------------------------------------------------------------------------
# Kernel 2a: attention with head-groups on the grid (lane-dense blocks).
# Block last dim hb = heads_per_block * head_dim is a multiple of 128.
# ---------------------------------------------------------------------------
def _attn_head_block_kernel(q_ref, k_ref, v_ref, o_ref, *, scale,
                            heads_per_block, head_dim, compute_dtype,
                            approx_recip):
    q_all = q_ref[0]   # (T, hb)
    k_all = k_ref[0]
    v_all = v_ref[0]

    outs = []
    for hi in range(heads_per_block):
        lo = hi * head_dim
        # Fold scale into q (T*hd multiplies instead of T*T).
        q = (q_all[:, lo:lo + head_dim].astype(jnp.float32) * scale).astype(compute_dtype)
        k = k_all[:, lo:lo + head_dim].astype(compute_dtype)
        v = v_all[:, lo:lo + head_dim].astype(compute_dtype)

        # QK^T without an explicit transpose: contract head_dim directly.
        s = lax.dot_general(
            q, k,
            dimension_numbers=(((1,), (1,)), ((), ())),
            preferred_element_type=jnp.float32,
        )  # (T, T), f32

        # Numerically stable softmax; one reciprocal per row (EUP in bf16 mode).
        s = s - jnp.max(s, axis=-1, keepdims=True)
        p = jnp.exp(s)
        inv = pl.reciprocal(jnp.sum(p, axis=-1, keepdims=True), approx=approx_recip)
        p = (p * inv).astype(compute_dtype)

        outs.append(jnp.dot(p, v, preferred_element_type=jnp.float32))

    o = outs[0] if heads_per_block == 1 else jnp.concatenate(outs, axis=-1)
    o_ref[0] = o.astype(o_ref.dtype)   # single lane-dense (T, hb) store


# ---------------------------------------------------------------------------
# Kernel 2b: fallback for tiny dims (dim not a multiple of 128): one full
# (T, 3*dim) slab per batch element, loop over all heads in-kernel.
# ---------------------------------------------------------------------------
def _attn_slab_kernel(qkv_ref, o_ref, *, scale, n_heads, head_dim,
                      compute_dtype, approx_recip):
    dim = n_heads * head_dim
    qkv = qkv_ref[0]   # (T, 3*dim)

    for h in range(n_heads):
        q = qkv[:, h * head_dim:(h + 1) * head_dim]
        k = qkv[:, dim + h * head_dim: dim + (h + 1) * head_dim]
        v = qkv[:, 2 * dim + h * head_dim: 2 * dim + (h + 1) * head_dim]

        q = (q.astype(jnp.float32) * scale).astype(compute_dtype)
        k = k.astype(compute_dtype)

        s = lax.dot_general(
            q, k,
            dimension_numbers=(((1,), (1,)), ((), ())),
            preferred_element_type=jnp.float32,
        )
        s = s - jnp.max(s, axis=-1, keepdims=True)
        p = jnp.exp(s)
        inv = pl.reciprocal(jnp.sum(p, axis=-1, keepdims=True), approx=approx_recip)
        p = (p * inv).astype(compute_dtype)

        o = jnp.dot(p, v.astype(compute_dtype), preferred_element_type=jnp.float32)
        o_ref[0, :, h * head_dim:(h + 1) * head_dim] = o.astype(o_ref.dtype)


def attention_core(qkv, n_heads, head_dim, scale, *, compute_dtype, out_dtype):
    B, T, three_dim = qkv.shape
    dim = n_heads * head_dim
    assert three_dim == 3 * dim
    approx_recip = jnp.dtype(compute_dtype) != jnp.dtype(jnp.float32)

    cost = pl.CostEstimate(
        flops=4 * B * n_heads * T * T * head_dim,
        transcendentals=B * n_heads * T * T,
        bytes_accessed=(B * T * 3 * dim) * qkv.dtype.itemsize
        + (B * T * dim) * jnp.dtype(out_dtype).itemsize,
    )

    # Smallest head group whose column width is a multiple of 128 lanes.
    hpb = None
    if dim % 128 == 0:
        for cand in range(1, n_heads + 1):
            if n_heads % cand == 0 and (cand * head_dim) % 128 == 0:
                hpb = cand
                break

    if hpb is not None:
        hb = hpb * head_dim
        n_groups = n_heads // hpb
        k_off = dim // hb
        v_off = 2 * dim // hb
        return pl.pallas_call(
            partial(_attn_head_block_kernel, scale=scale, heads_per_block=hpb,
                    head_dim=head_dim, compute_dtype=compute_dtype,
                    approx_recip=approx_recip),
            out_shape=jax.ShapeDtypeStruct((B, T, dim), out_dtype),
            grid=(B, n_groups),
            in_specs=[
                pl.BlockSpec((1, T, hb), lambda b, g: (b, 0, g)),
                pl.BlockSpec((1, T, hb), lambda b, g: (b, 0, k_off + g)),
                pl.BlockSpec((1, T, hb), lambda b, g: (b, 0, v_off + g)),
            ],
            out_specs=pl.BlockSpec((1, T, hb), lambda b, g: (b, 0, g)),
            compiler_params=pltpu.CompilerParams(
                dimension_semantics=("parallel", "parallel"),
            ),
            cost_estimate=cost,
        )(qkv, qkv, qkv)

    # Fallback: tiny dims (e.g. the small correctness test).
    return pl.pallas_call(
        partial(_attn_slab_kernel, scale=scale, n_heads=n_heads,
                head_dim=head_dim, compute_dtype=compute_dtype,
                approx_recip=approx_recip),
        out_shape=jax.ShapeDtypeStruct((B, T, dim), out_dtype),
        grid=(B,),
        in_specs=[pl.BlockSpec((1, T, 3 * dim), lambda b: (b, 0, 0))],
        out_specs=pl.BlockSpec((1, T, dim), lambda b: (b, 0, 0)),
        compiler_params=pltpu.CompilerParams(dimension_semantics=("parallel",)),
        cost_estimate=cost,
    )(qkv)


# ---------------------------------------------------------------------------
# Full forward pass (only free metadata reshapes between kernels).
# ---------------------------------------------------------------------------
def attention_forward(x, params, n_heads, compute_dtype=jnp.bfloat16):
    B, T, dim = x.shape
    head_dim = dim // n_heads
    scale = head_dim ** (-0.5)
    compute_dtype = jnp.dtype(compute_dtype)
    out_dtype = x.dtype

    # Pre-cast weights to the MXU feed dtype in HBM (halves weight DMA in bf16).
    w_qkv = params["w_qkv"].astype(compute_dtype)
    w_proj = params["w_proj"].astype(compute_dtype)

    # qkv projection: (B*T, dim) -> (B*T, 3*dim); intermediate activations are
    # stored in the compute dtype to halve inter-kernel HBM traffic.
    qkv = linear(x.reshape(B * T, dim), w_qkv, params["b_qkv"],
                 compute_dtype=compute_dtype, out_dtype=compute_dtype)

    # Columns are already ordered [qkv_idx, head, head_dim] (PyTorch reshape
    # order) so the attention kernels slice heads directly -- no transposes.
    qkv = qkv.reshape(B, T, 3 * dim)

    out = attention_core(qkv, n_heads, head_dim, scale,
                         compute_dtype=compute_dtype,
                         out_dtype=compute_dtype)                # (B, T, dim)

    # output projection, written back in the input dtype.
    y = linear(out.reshape(B * T, dim), w_proj, params["b_proj"],
               compute_dtype=compute_dtype, out_dtype=out_dtype)
    return y.reshape(B, T, dim)


# ---------------------------------------------------------------------------
# Pure-JAX reference (mirrors the PyTorch forward exactly)
# ---------------------------------------------------------------------------
def attention_reference(x, params, n_heads):
    B, T, dim = x.shape
    head_dim = dim // n_heads
    scale = head_dim ** (-0.5)
    qkv = x @ params["w_qkv"] + params["b_qkv"]
    qkv = qkv.reshape(B, T, 3, n_heads, head_dim)
    qkv = jnp.transpose(qkv, (2, 0, 3, 1, 4))
    q, k, v = qkv[0], qkv[1], qkv[2]
    dp = jnp.einsum("bhqd,bhkd->bhqk", q, k) * scale
    attn = jax.nn.softmax(dp, axis=-1)
    wa = jnp.einsum("bhqk,bhkd->bhqd", attn, v)
    wa = jnp.transpose(wa, (0, 2, 1, 3)).reshape(B, T, dim)
    return wa @ params["w_proj"] + params["b_proj"]


if __name__ == "__main__":
    root_key = jax.random.PRNGKey(0)

    def run_case(B, T, DIM, N_HEADS, case_id):
        key = jax.random.fold_in(root_key, case_id)
        kx, kw1, kb1, kw2, kb2 = jax.random.split(key, 5)
        x = jax.random.normal(kx, (B, T, DIM), dtype=jnp.float32)
        params = {
            "w_qkv": jax.random.normal(kw1, (DIM, 3 * DIM), dtype=jnp.float32) * 0.05,
            "b_qkv": jax.random.normal(kb1, (3 * DIM,), dtype=jnp.float32) * 0.05,
            "w_proj": jax.random.normal(kw2, (DIM, DIM), dtype=jnp.float32) * 0.05,
            "b_proj": jax.random.normal(kb2, (DIM,), dtype=jnp.float32) * 0.05,
        }
        ref = attention_reference(x, params, N_HEADS)

        fwd = jax.jit(attention_forward, static_argnums=(2, 3))

        # Exact-path check (f32 MXU feed, exact reciprocal): bit-tight.
        out_f32 = jax.block_until_ready(fwd(x, params, N_HEADS, jnp.float32))
        assert out_f32.shape == (B, T, DIM), out_f32.shape
        assert jnp.allclose(out_f32, ref, atol=1e-4, rtol=1e-4), \
            float(jnp.max(jnp.abs(out_f32 - ref)))

        # Default fast path (bf16 MXU feed, f32 accumulation): loose tolerance.
        out_bf16 = jax.block_until_ready(fwd(x, params, N_HEADS, jnp.bfloat16))
        assert out_bf16.shape == (B, T, DIM), out_bf16.shape
        assert jnp.allclose(out_bf16, ref, atol=3e-2, rtol=3e-2), \
            float(jnp.max(jnp.abs(out_bf16 - ref)))

    # Tiny-dim case (exercises the full-slab fallback attention kernel).
    run_case(B=2, T=8, DIM=32, N_HEADS=4, case_id=0)
    # head_dim=64 case (exercises the head-on-grid lane-dense attention kernel).
    run_case(B=2, T=8, DIM=256, N_HEADS=4, case_id=1)

    print("KERNEL_OK")
</pallas_src>

<mosaic_0001>
module attributes {stable_mosaic.version = 11 : i64} {
  func.func @_attn_slab_kernel(%arg0: i32, %arg1: memref<1x8x96xf32, #tpu.memory_space<vmem>>, %arg2: memref<1x8x32xf32, #tpu.memory_space<vmem>>) attributes {dimension_semantics = [#tpu.dimension_semantics<parallel>], iteration_bounds = array<i64: 2>, scalar_prefetch = 0 : i64, scratch_operands = 0 : i64, tpu.core_type = #tpu.core_type<tc>, window_params = [{transform_indices = @transform_0, window_bounds = array<i64: 1, 8, 96>}, {transform_indices = @transform_1, window_bounds = array<i64: 1, 8, 32>}]} {
    %c0 = arith.constant 0 : index
    %c0_0 = arith.constant 0 : index
    %c0_1 = arith.constant 0 : index
    %0 = vector.load %arg1[%c0, %c0_0, %c0_1] : memref<1x8x96xf32, #tpu.memory_space<vmem>>, vector<1x8x96xf32>
    %1 = vector.shape_cast %0 : vector<1x8x96xf32> to vector<8x96xf32>
    %2 = vector.extract_strided_slice %1 {offsets = [0, 0], sizes = [8, 8], strides = [1, 1]} : vector<8x96xf32> to vector<8x8xf32>
    %3 = vector.extract_strided_slice %1 {offsets = [0, 32], sizes = [8, 8], strides = [1, 1]} : vector<8x96xf32> to vector<8x8xf32>
    %4 = vector.extract_strided_slice %1 {offsets = [0, 64], sizes = [8, 8], strides = [1, 1]} : vector<8x96xf32> to vector<8x8xf32>
    %cst = arith.constant 0.353553385 : f32
    %5 = vector.broadcast %cst : f32 to vector<8x8xf32>
    %6 = arith.mulf %2, %5 : vector<8x8xf32>
    %cst_2 = arith.constant dense<0.000000e+00> : vector<8x8xf32>
    %7 = tpu.matmul %6, %3, %cst_2 {dimension_numbers = #tpu.dot_dimension_numbers<[1], [1], [0], [0], [0, 0, 1, 0], [], []>} : vector<8x8xf32>, vector<8x8xf32>, vector<8x8xf32> -> vector<8x8xf32>
    %cst_3 = arith.constant dense<0xFF800000> : vector<8xf32>
    %8 = vector.multi_reduction <maximumf>, %7, %cst_3 [1] : vector<8x8xf32> to vector<8xf32>
    %9 = vector.shape_cast %8 : vector<8xf32> to vector<8x1xf32>
    %10 = vector.broadcast %9 : vector<8x1xf32> to vector<8x8xf32>
    %11 = arith.subf %7, %10 : vector<8x8xf32>
    %12 = math.exp %11 : vector<8x8xf32>
    %cst_4 = arith.constant dense<0.000000e+00> : vector<8xf32>
    %13 = vector.multi_reduction <add>, %12, %cst_4 [1] : vector<8x8xf32> to vector<8xf32>
    %14 = vector.shape_cast %13 : vector<8xf32> to vector<8x1xf32>
    %15 = tpu.reciprocal %14 : vector<8x1xf32> -> vector<8x1xf32>
    %16 = vector.broadcast %15 : vector<8x1xf32> to vector<8x8xf32>
    %17 = arith.mulf %12, %16 : vector<8x8xf32>
    %cst_5 = arith.constant dense<0.000000e+00> : vector<8x8xf32>
    %18 = tpu.matmul %17, %4, %cst_5 {dimension_numbers = #tpu.dot_dimension_numbers<[1], [0], [0], [1], [0, 0, 1, 1], [], []>} : vector<8x8xf32>, vector<8x8xf32>, vector<8x8xf32> -> vector<8x8xf32>
    %c0_6 = arith.constant 0 : index
    %c0_7 = arith.constant 0 : index
    %c0_8 = arith.constant 0 : index
    %19 = vector.load %arg2[%c0_6, %c0_7, %c0_8] : memref<1x8x32xf32, #tpu.memory_space<vmem>>, vector<1x8x8xf32>
    %20 = vector.shape_cast %19 : vector<1x8x8xf32> to vector<8x8xf32>
    %21 = vector.shape_cast %18 : vector<8x8xf32> to vector<1x8x8xf32>
    tpu.vector_store %arg2[%c0_6, %c0_7, %c0_8], %21 {strides = array<i32>} : memref<1x8x32xf32, #tpu.memory_space<vmem>>, vector<1x8x8xf32>,
    %22 = vector.extract_strided_slice %1 {offsets = [0, 8], sizes = [8, 8], strides = [1, 1]} : vector<8x96xf32> to vector<8x8xf32>
    %23 = vector.extract_strided_slice %1 {offsets = [0, 40], sizes = [8, 8], strides = [1, 1]} : vector<8x96xf32> to vector<8x8xf32>
    %24 = vector.extract_strided_slice %1 {offsets = [0, 72], sizes = [8, 8], strides = [1, 1]} : vector<8x96xf32> to vector<8x8xf32>
    %cst_9 = arith.constant 0.353553385 : f32
    %25 = vector.broadcast %cst_9 : f32 to vector<8x8xf32>
    %26 = arith.mulf %22, %25 : vector<8x8xf32>
    %cst_10 = arith.constant dense<0.000000e+00> : vector<8x8xf32>
    %27 = tpu.matmul %26, %23, %cst_10 {dimension_numbers = #tpu.dot_dimension_numbers<[1], [1], [0], [0], [0, 0, 1, 0], [], []>} : vector<8x8xf32>, vector<8x8xf32>, vector<8x8xf32> -> vector<8x8xf32>
    %cst_11 = arith.constant dense<0xFF800000> : vector<8xf32>
    %28 = vector.multi_reduction <maximumf>, %27, %cst_11 [1] : vector<8x8xf32> to vector<8xf32>
    %29 = vector.shape_cast %28 : vector<8xf32> to vector<8x1xf32>
    %30 = vector.broadcast %29 : vector<8x1xf32> to vector<8x8xf32>
    %31 = arith.subf %27, %30 : vector<8x8xf32>
    %32 = math.exp %31 : vector<8x8xf32>
    %cst_12 = arith.constant dense<0.000000e+00> : vector<8xf32>
    %33 = vector.multi_reduction <add>, %32, %cst_12 [1] : vector<8x8xf32> to vector<8xf32>
    %34 = vector.shape_cast %33 : vector<8xf32> to vector<8x1xf32>
    %35 = tpu.reciprocal %34 : vector<8x1xf32> -> vector<8x1xf32>
    %36 = vector.broadcast %35 : vector<8x1xf32> to vector<8x8xf32>
    %37 = arith.mulf %32, %36 : vector<8x8xf32>
    %cst_13 = arith.constant dense<0.000000e+00> : vector<8x8xf32>
    %38 = tpu.matmul %37, %24, %cst_13 {dimension_numbers = #tpu.dot_dimension_numbers<[1], [0], [0], [1], [0, 0, 1, 1], [], []>} : vector<8x8xf32>, vector<8x8xf32>, vector<8x8xf32> -> vector<8x8xf32>
    %c0_14 = arith.constant 0 : index
    %c0_15 = arith.constant 0 : index
    %c8 = arith.constant 8 : index
    %39 = vector.load %arg2[%c0_14, %c0_15, %c8] : memref<1x8x32xf32, #tpu.memory_space<vmem>>, vector<1x8x8xf32>
    %40 = vector.shape_cast %39 : vector<1x8x8xf32> to vector<8x8xf32>
    %41 = vector.shape_cast %38 : vector<8x8xf32> to vector<1x8x8xf32>
    tpu.vector_store %arg2[%c0_14, %c0_15, %c8], %41 {strides = array<i32>} : memref<1x8x32xf32, #tpu.memory_space<vmem>>, vector<1x8x8xf32>,
    %42 = vector.extract_strided_slice %1 {offsets = [0, 16], sizes = [8, 8], strides = [1, 1]} : vector<8x96xf32> to vector<8x8xf32>
    %43 = vector.extract_strided_slice %1 {offsets = [0, 48], sizes = [8, 8], strides = [1, 1]} : vector<8x96xf32> to vector<8x8xf32>
    %44 = vector.extract_strided_slice %1 {offsets = [0, 80], sizes = [8, 8], strides = [1, 1]} : vector<8x96xf32> to vector<8x8xf32>
    %cst_16 = arith.constant 0.353553385 : f32
    %45 = vector.broadcast %cst_16 : f32 to vector<8x8xf32>
    %46 = arith.mulf %42, %45 : vector<8x8xf32>
    %cst_17 = arith.constant dense<0.000000e+00> : vector<8x8xf32>
    %47 = tpu.matmul %46, %43, %cst_17 {dimension_numbers = #tpu.dot_dimension_numbers<[1], [1], [0], [0], [0, 0, 1, 0], [], []>} : vector<8x8xf32>, vector<8x8xf32>, vector<8x8xf32> -> vector<8x8xf32>
    %cst_18 = arith.constant dense<0xFF800000> : vector<8xf32>
    %48 = vector.multi_reduction <maximumf>, %47, %cst_18 [1] : vector<8x8xf32> to vector<8xf32>
    %49 = vector.shape_cast %48 : vector<8xf32> to vector<8x1xf32>
    %50 = vector.broadcast %49 : vector<8x1xf32> to vector<8x8xf32>
    %51 = arith.subf %47, %50 : vector<8x8xf32>
    %52 = math.exp %51 : vector<8x8xf32>
    %cst_19 = arith.constant dense<0.000000e+00> : vector<8xf32>
    %53 = vector.multi_reduction <add>, %52, %cst_19 [1] : vector<8x8xf32> to vector<8xf32>
    %54 = vector.shape_cast %53 : vector<8xf32> to vector<8x1xf32>
    %55 = tpu.reciprocal %54 : vector<8x1xf32> -> vector<8x1xf32>
    %56 = vector.broadcast %55 : vector<8x1xf32> to vector<8x8xf32>
    %57 = arith.mulf %52, %56 : vector<8x8xf32>
    %cst_20 = arith.constant dense<0.000000e+00> : vector<8x8xf32>
    %58 = tpu.matmul %57, %44, %cst_20 {dimension_numbers = #tpu.dot_dimension_numbers<[1], [0], [0], [1], [0, 0, 1, 1], [], []>} : vector<8x8xf32>, vector<8x8xf32>, vector<8x8xf32> -> vector<8x8xf32>
    %c0_21 = arith.constant 0 : index
    %c0_22 = arith.constant 0 : index
    %c16 = arith.constant 16 : index
    %59 = vector.load %arg2[%c0_21, %c0_22, %c16] : memref<1x8x32xf32, #tpu.memory_space<vmem>>, vector<1x8x8xf32>
    %60 = vector.shape_cast %59 : vector<1x8x8xf32> to vector<8x8xf32>
    %61 = vector.shape_cast %58 : vector<8x8xf32> to vector<1x8x8xf32>
    tpu.vector_store %arg2[%c0_21, %c0_22, %c16], %61 {strides = array<i32>} : memref<1x8x32xf32, #tpu.memory_space<vmem>>, vector<1x8x8xf32>,
    %62 = vector.extract_strided_slice %1 {offsets = [0, 24], sizes = [8, 8], strides = [1, 1]} : vector<8x96xf32> to vector<8x8xf32>
    %63 = vector.extract_strided_slice %1 {offsets = [0, 56], sizes = [8, 8], strides = [1, 1]} : vector<8x96xf32> to vector<8x8xf32>
    %64 = vector.extract_strided_slice %1 {offsets = [0, 88], sizes = [8, 8], strides = [1, 1]} : vector<8x96xf32> to vector<8x8xf32>
    %cst_23 = arith.constant 0.353553385 : f32
    %65 = vector.broadcast %cst_23 : f32 to vector<8x8xf32>
    %66 = arith.mulf %62, %65 : vector<8x8xf32>
    %cst_24 = arith.constant dense<0.000000e+00> : vector<8x8xf32>
    %67 = tpu.matmul %66, %63, %cst_24 {dimension_numbers = #tpu.dot_dimension_numbers<[1], [1], [0], [0], [0, 0, 1, 0], [], []>} : vector<8x8xf32>, vector<8x8xf32>, vector<8x8xf32> -> vector<8x8xf32>
    %cst_25 = arith.constant dense<0xFF800000> : vector<8xf32>
    %68 = vector.multi_reduction <maximumf>, %67, %cst_25 [1] : vector<8x8xf32> to vector<8xf32>
    %69 = vector.shape_cast %68 : vector<8xf32> to vector<8x1xf32>
    %70 = vector.broadcast %69 : vector<8x1xf32> to vector<8x8xf32>
    %71 = arith.subf %67, %70 : vector<8x8xf32>
    %72 = math.exp %71 : vector<8x8xf32>
    %cst_26 = arith.constant dense<0.000000e+00> : vector<8xf32>
    %73 = vector.multi_reduction <add>, %72, %cst_26 [1] : vector<8x8xf32> to vector<8xf32>
    %74 = vector.shape_cast %73 : vector<8xf32> to vector<8x1xf32>
    %75 = tpu.reciprocal %74 : vector<8x1xf32> -> vector<8x1xf32>
    %76 = vector.broadcast %75 : vector<8x1xf32> to vector<8x8xf32>
    %77 = arith.mulf %72, %76 : vector<8x8xf32>
    %cst_27 = arith.constant dense<0.000000e+00> : vector<8x8xf32>
    %78 = tpu.matmul %77, %64, %cst_27 {dimension_numbers = #tpu.dot_dimension_numbers<[1], [0], [0], [1], [0, 0, 1, 1], [], []>} : vector<8x8xf32>, vector<8x8xf32>, vector<8x8xf32> -> vector<8x8xf32>
    %c0_28 = arith.constant 0 : index
    %c0_29 = arith.constant 0 : index
    %c24 = arith.constant 24 : index
    %79 = vector.load %arg2[%c0_28, %c0_29, %c24] : memref<1x8x32xf32, #tpu.memory_space<vmem>>, vector<1x8x8xf32>
    %80 = vector.shape_cast %79 : vector<1x8x8xf32> to vector<8x8xf32>
    %81 = vector.shape_cast %78 : vector<8x8xf32> to vector<1x8x8xf32>
    tpu.vector_store %arg2[%c0_28, %c0_29, %c24], %81 {strides = array<i32>} : memref<1x8x32xf32, #tpu.memory_space<vmem>>, vector<1x8x8xf32>,
    return
  }
  func.func @transform_0(%arg0: i32) -> (i32, i32, i32) {
    %c0_i32 = arith.constant 0 : i32
    %c0_i32_0 = arith.constant 0 : i32
    %c0_i32_1 = arith.constant 0 : i32
    return %arg0, %c0_i32, %c0_i32_0 : i32, i32, i32
  }
  func.func @transform_1(%arg0: i32) -> (i32, i32, i32) {
    %c0_i32 = arith.constant 0 : i32
    %c0_i32_0 = arith.constant 0 : i32
    %c0_i32_1 = arith.constant 0 : i32
    return %arg0, %c0_i32, %c0_i32_0 : i32, i32, i32
  }
}

module attributes {stable_mosaic.version = 11 : i64} {
  func.func @_linear_kernel(%arg0: i32, %arg1: i32, %arg2: i32, %arg3: memref<16x32xf32, #tpu.memory_space<vmem>>, %arg4: memref<32x96xf32, #tpu.memory_space<vmem>>, %arg5: memref<1x96xf32, #tpu.memory_space<vmem>>, %arg6: memref<16x96xf32, #tpu.memory_space<vmem>>, %arg7: memref<16x96xf32, #tpu.memory_space<vmem>>) attributes {dimension_semantics = [#tpu.dimension_semantics<parallel>, #tpu.dimension_semantics<parallel>, #tpu.dimension_semantics<arbitrary>], iteration_bounds = array<i64: 1, 1, 1>, scalar_prefetch = 0 : i64, scratch_operands = 1 : i64, tpu.core_type = #tpu.core_type<tc>, window_params = [{transform_indices = @transform_0, window_bounds = array<i64: 16, 32>}, {transform_indices = @transform_1, window_bounds = array<i64: 32, 96>}, {transform_indices = @transform_2, window_bounds = array<i64: 1, 96>}, {transform_indices = @transform_3, window_bounds = array<i64: 16, 96>}]} {
    %c0_i32 = arith.constant 0 : i32
    %0 = arith.cmpi eq, %arg2, %c0_i32 : i32
    %1 = arith.extui %0 : i1 to i32
    %c0_i32_0 = arith.constant 0 : i32
    %2 = arith.cmpi ne, %1, %c0_i32_0 : i32
    scf.if %2 {
      %cst_10 = arith.constant 0.000000e+00 : f32
      %12 = vector.broadcast %cst_10 : f32 to vector<16x96xf32>
      %c0_11 = arith.constant 0 : index
      %c0_12 = arith.constant 0 : index
      %13 = vector.load %arg7[%c0_11, %c0_12] : memref<16x96xf32, #tpu.memory_space<vmem>>, vector<16x96xf32>
      tpu.vector_store %arg7[%c0_11, %c0_12], %12 {strides = array<i32>} : memref<16x96xf32, #tpu.memory_space<vmem>>, vector<16x96xf32>,
    } else {
    }
    %c0 = arith.constant 0 : index
    %c0_1 = arith.constant 0 : index
    %3 = vector.load %arg7[%c0, %c0_1] : memref<16x96xf32, #tpu.memory_space<vmem>>, vector<16x96xf32>
    %c0_2 = arith.constant 0 : index
    %c0_3 = arith.constant 0 : index
    %4 = vector.load %arg3[%c0_2, %c0_3] : memref<16x32xf32, #tpu.memory_space<vmem>>, vector<16x32xf32>
    %c0_4 = arith.constant 0 : index
    %c0_5 = arith.constant 0 : index
    %5 = vector.load %arg4[%c0_4, %c0_5] : memref<32x96xf32, #tpu.memory_space<vmem>>, vector<32x96xf32>
    %cst = arith.constant dense<0.000000e+00> : vector<16x96xf32>
    %6 = tpu.matmul %4, %5, %cst {dimension_numbers = #tpu.dot_dimension_numbers<[1], [0], [0], [1], [0, 0, 1, 1], [], []>} : vector<16x32xf32>, vector<32x96xf32>, vector<16x96xf32> -> vector<16x96xf32>
    %7 = arith.addf %3, %6 : vector<16x96xf32>
    %c0_6 = arith.constant 0 : index
    %c0_7 = arith.constant 0 : index
    %8 = vector.load %arg7[%c0_6, %c0_7] : memref<16x96xf32, #tpu.memory_space<vmem>>, vector<16x96xf32>
    tpu.vector_store %arg7[%c0_6, %c0_7], %7 {strides = array<i32>} : memref<16x96xf32, #tpu.memory_space<vmem>>, vector<16x96xf32>,
    %c0_i32_8 = arith.constant 0 : i32
    %9 = arith.cmpi eq, %arg2, %c0_i32_8 : i32
    %10 = arith.extui %9 : i1 to i32
    %c0_i32_9 = arith.constant 0 : i32
    %11 = arith.cmpi ne, %10, %c0_i32_9 : i32
    scf.if %11 {
      %c0_10 = arith.constant 0 : index
      %c0_11 = arith.constant 0 : index
      %12 = vector.load %arg7[%c0_10, %c0_11] : memref<16x96xf32, #tpu.memory_space<vmem>>, vector<16x96xf32>
      %c0_12 = arith.constant 0 : index
      %c0_13 = arith.constant 0 : index
      %13 = vector.load %arg5[%c0_12, %c0_13] : memref<1x96xf32, #tpu.memory_space<vmem>>, vector<1x96xf32>
      %14 = vector.broadcast %13 : vector<1x96xf32> to vector<16x96xf32>
      %15 = arith.addf %12, %14 : vector<16x96xf32>
      %c0_14 = arith.constant 0 : index
      %c0_15 = arith.constant 0 : index
      %16 = vector.load %arg6[%c0_14, %c0_15] : memref<16x96xf32, #tpu.memory_space<vmem>>, vector<16x96xf32>
      tpu.vector_store %arg6[%c0_14, %c0_15], %15 {strides = array<i32>} : memref<16x96xf32, #tpu.memory_space<vmem>>, vector<16x96xf32>,
    } else {
    }
    return
  }
  func.func @transform_0(%arg0: i32, %arg1: i32, %arg2: i32) -> (i32, i32) {
    %c0_i32 = arith.constant 0 : i32
    return %arg0, %arg2 : i32, i32
  }
  func.func @transform_1(%arg0: i32, %arg1: i32, %arg2: i32) -> (i32, i32) {
    %c0_i32 = arith.constant 0 : i32
    return %arg2, %arg1 : i32, i32
  }
  func.func @transform_2(%arg0: i32, %arg1: i32, %arg2: i32) -> (i32, i32) {
    %c0_i32 = arith.constant 0 : i32
    %c0_i32_0 = arith.constant 0 : i32
    return %c0_i32, %arg1 : i32, i32
  }
  func.func @transform_3(%arg0: i32, %arg1: i32, %arg2: i32) -> (i32, i32) {
    %c0_i32 = arith.constant 0 : i32
    return %arg0, %arg1 : i32, i32
  }
}

module attributes {stable_mosaic.version = 11 : i64} {
  func.func @_linear_kernel(%arg0: i32, %arg1: i32, %arg2: i32, %arg3: memref<16x32xf32, #tpu.memory_space<vmem>>, %arg4: memref<32x32xf32, #tpu.memory_space<vmem>>, %arg5: memref<1x32xf32, #tpu.memory_space<vmem>>, %arg6: memref<16x32xf32, #tpu.memory_space<vmem>>, %arg7: memref<16x32xf32, #tpu.memory_space<vmem>>) attributes {dimension_semantics = [#tpu.dimension_semantics<parallel>, #tpu.dimension_semantics<parallel>, #tpu.dimension_semantics<arbitrary>], iteration_bounds = array<i64: 1, 1, 1>, scalar_prefetch = 0 : i64, scratch_operands = 1 : i64, tpu.core_type = #tpu.core_type<tc>, window_params = [{transform_indices = @transform_0, window_bounds = array<i64: 16, 32>}, {transform_indices = @transform_1, window_bounds = array<i64: 32, 32>}, {transform_indices = @transform_2, window_bounds = array<i64: 1, 32>}, {transform_indices = @transform_3, window_bounds = array<i64: 16, 32>}]} {
    %c0_i32 = arith.constant 0 : i32
    %0 = arith.cmpi eq, %arg2, %c0_i32 : i32
    %1 = arith.extui %0 : i1 to i32
    %c0_i32_0 = arith.constant 0 : i32
    %2 = arith.cmpi ne, %1, %c0_i32_0 : i32
    scf.if %2 {
      %cst_10 = arith.constant 0.000000e+00 : f32
      %12 = vector.broadcast %cst_10 : f32 to vector<16x32xf32>
      %c0_11 = arith.constant 0 : index
      %c0_12 = arith.constant 0 : index
      %13 = vector.load %arg7[%c0_11, %c0_12] : memref<16x32xf32, #tpu.memory_space<vmem>>, vector<16x32xf32>
      tpu.vector_store %arg7[%c0_11, %c0_12], %12 {strides = array<i32>} : memref<16x32xf32, #tpu.memory_space<vmem>>, vector<16x32xf32>,
    } else {
    }
    %c0 = arith.constant 0 : index
    %c0_1 = arith.constant 0 : index
    %3 = vector.load %arg7[%c0, %c0_1] : memref<16x32xf32, #tpu.memory_space<vmem>>, vector<16x32xf32>
    %c0_2 = arith.constant 0 : index
    %c0_3 = arith.constant 0 : index
    %4 = vector.load %arg3[%c0_2, %c0_3] : memref<16x32xf32, #tpu.memory_space<vmem>>, vector<16x32xf32>
    %c0_4 = arith.constant 0 : index
    %c0_5 = arith.constant 0 : index
    %5 = vector.load %arg4[%c0_4, %c0_5] : memref<32x32xf32, #tpu.memory_space<vmem>>, vector<32x32xf32>
    %cst = arith.constant dense<0.000000e+00> : vector<16x32xf32>
    %6 = tpu.matmul %4, %5, %cst {dimension_numbers = #tpu.dot_dimension_numbers<[1], [0], [0], [1], [0, 0, 1, 1], [], []>} : vector<16x32xf32>, vector<32x32xf32>, vector<16x32xf32> -> vector<16x32xf32>
    %7 = arith.addf %3, %6 : vector<16x32xf32>
    %c0_6 = arith.constant 0 : index
    %c0_7 = arith.constant 0 : index
    %8 = vector.load %arg7[%c0_6, %c0_7] : memref<16x32xf32, #tpu.memory_space<vmem>>, vector<16x32xf32>
    tpu.vector_store %arg7[%c0_6, %c0_7], %7 {strides = array<i32>} : memref<16x32xf32, #tpu.memory_space<vmem>>, vector<16x32xf32>,
    %c0_i32_8 = arith.constant 0 : i32
    %9 = arith.cmpi eq, %arg2, %c0_i32_8 : i32
    %10 = arith.extui %9 : i1 to i32
    %c0_i32_9 = arith.constant 0 : i32
    %11 = arith.cmpi ne, %10, %c0_i32_9 : i32
    scf.if %11 {
      %c0_10 = arith.constant 0 : index
      %c0_11 = arith.constant 0 : index
      %12 = vector.load %arg7[%c0_10, %c0_11] : memref<16x32xf32, #tpu.memory_space<vmem>>, vector<16x32xf32>
      %c0_12 = arith.constant 0 : index
      %c0_13 = arith.constant 0 : index
      %13 = vector.load %arg5[%c0_12, %c0_13] : memref<1x32xf32, #tpu.memory_space<vmem>>, vector<1x32xf32>
      %14 = vector.broadcast %13 : vector<1x32xf32> to vector<16x32xf32>
      %15 = arith.addf %12, %14 : vector<16x32xf32>
      %c0_14 = arith.constant 0 : index
      %c0_15 = arith.constant 0 : index
      %16 = vector.load %arg6[%c0_14, %c0_15] : memref<16x32xf32, #tpu.memory_space<vmem>>, vector<16x32xf32>
      tpu.vector_store %arg6[%c0_14, %c0_15], %15 {strides = array<i32>} : memref<16x32xf32, #tpu.memory_space<vmem>>, vector<16x32xf32>,
    } else {
    }
    return
  }
  func.func @transform_0(%arg0: i32, %arg1: i32, %arg2: i32) -> (i32, i32) {
    %c0_i32 = arith.constant 0 : i32
    return %arg0, %arg2 : i32, i32
  }
  func.func @transform_1(%arg0: i32, %arg1: i32, %arg2: i32) -> (i32, i32) {
    %c0_i32 = arith.constant 0 : i32
    return %arg2, %arg1 : i32, i32
  }
  func.func @transform_2(%arg0: i32, %arg1: i32, %arg2: i32) -> (i32, i32) {
    %c0_i32 = arith.constant 0 : i32
    %c0_i32_0 = arith.constant 0 : i32
    return %c0_i32, %arg1 : i32, i32
  }
  func.func @transform_3(%arg0: i32, %arg1: i32, %arg2: i32) -> (i32, i32) {
    %c0_i32 = arith.constant 0 : i32
    return %arg0, %arg1 : i32, i32
  }
}

</mosaic_0001>

<llo_original>
// kernel: attention_forward.4
$region0: #{attention_forward.4}
  #allocation0 [shape = 'u32[]', space=smem, size = 0x4, offset = 0x4, fixed_abs, tag = 'smem constant byte address 0x4 - core index']
  #allocation1 [shape = 'u32[72,128]{1,0:T(1,128)}', space=vmem, size = 0x9000, scoped, tag = 'internal scratch']
  %s0 = inlined_call_operand.vmem [shape: f32[2,8,96], index: 0, kind: input, shape index: {}]
  %s1 = inlined_call_operand.vmem [shape: f32[2,8,32], index: 1, kind: output, shape index: {}]
  %s2 = sld [smem:[#allocation0]]
  $region37: #{attention_forward.4} parent=0
    _
  %s4 = ssub.s32 1, %s2
  %s5 = scalar_select 0, %s4, %s2
  loop: start=0, step=1, limit=4
  $region2: #{attention_forward.4} parent=0 // loop_pre_header
    _
  $region3: #{attention_forward.4} parent=0 // loop_header
    %s7 = sphi 0, %s11
    %p8 = scmp.ge.s32.totalorder %s7, 4
    %s17 = sphi 0, %s19
    %s20 = sphi 0, %s17
    %s21 = sphi 0, %s20
    %s37 = sphi 0, %s21
    %s43 = sphi 0, %s45
    %s46 = sphi 0, %s43
    %s47 = sphi 0, %s46
    %s63 = sphi 0, %s47
  $region4: #{attention_forward.4} parent=0 // loop_header_branch
    %10 = sbr.rel (%p8) target = $region8
  $region5: #{attention_forward.4} parent=0 // loop_body
    %s12 = ssub.s32 %s7, 1
    %s13 = ssub.s32 %s7, 2
    %s14 = sadd.s32 %s7, 1
    %s15 = ssub.s32 %s7, %s14
    %p16 = scmp.eq.s32.totalorder %s15, 0
    %s18 = sadd.s32 %s17, 1
    %s19 = scalar_select %p16, %s17, %s18
    %p22 = pneg %p16
    %p23 = scmp.eq.s32.totalorder %s7, 1
    %p24 = por %p22, %p23
    %p25 = scmp.ne.s32.totalorder %s17, %s20
    %p26 = scmp.eq.s32.totalorder %s7, 0
    %p27 = por %p25, %p26
    %p28 = scmp.ne.s32.totalorder %s17, %s20
    %p29 = scmp.eq.s32.totalorder %s12, 1
    %p30 = por %p28, %p29
    %p31 = scmp.ne.s32.totalorder %s20, %s21
    %p32 = scmp.eq.s32.totalorder %s12, 0
    %p33 = por %p31, %p32
    %p34 = scmp.ne.s32.totalorder %s20, %s21
    %p35 = scmp.eq.s32.totalorder %s13, 1
    %p36 = por %p34, %p35
    %p38 = scmp.ne.s32.totalorder %s21, %s37
    %p39 = scmp.eq.s32.totalorder %s13, 0
    %p40 = por %p38, %p39
    %s41 = ssub.s32 %s7, %s14
    %p42 = scmp.eq.s32.totalorder %s41, 0
    %s44 = sadd.s32 %s43, 1
    %s45 = scalar_select %p42, %s43, %s44
    %p48 = pneg %p42
    %p49 = scmp.eq.s32.totalorder %s7, 1
    %p50 = por %p48, %p49
    %p51 = scmp.ne.s32.totalorder %s43, %s46
    %p52 = scmp.eq.s32.totalorder %s7, 0
    %p53 = por %p51, %p52
    %p54 = scmp.ne.s32.totalorder %s43, %s46
    %p55 = scmp.eq.s32.totalorder %s12, 1
    %p56 = por %p54, %p55
    %p57 = scmp.ne.s32.totalorder %s46, %s47
    %p58 = scmp.eq.s32.totalorder %s12, 0
    %p59 = por %p57, %p58
    %p60 = scmp.ne.s32.totalorder %s46, %s47
    %p61 = scmp.eq.s32.totalorder %s13, 1
    %p62 = por %p60, %p61
    %p64 = scmp.ne.s32.totalorder %s47, %s63
    %p65 = scmp.eq.s32.totalorder %s13, 0
    %p66 = por %p64, %p65
    %p67 = scmp.le.s32.totalorder 1, %s7
    %p68 = scmp.lt.s32.totalorder %s7, 3
    %p69 = pnand %p67, %p68
    %p70 = pneg %p69
    // Predicated region
    $region9: #{attention_forward.4} parent=5 // pred_check
      _
    $region10: #{attention_forward.4} parent=5 // pred_check_branch
      %72 = sbr.rel (%p69) target = $region12
    $region11: #{attention_forward.4} parent=5 // pred_region
      %s73 = ssub.s32 %s7, 1
    $region12: #{attention_forward.4} parent=5 // pred_fallthru
      _
    %p74 = scmp.lt.s32.totalorder %s7, 2
    // Predicated region
    $region13: #{attention_forward.4} parent=5 // pred_check
      %p75 = pneg %p74
    $region14: #{attention_forward.4} parent=5 // pred_check_branch
      %77 = sbr.rel (%p75) target = $region16
    $region15: #{attention_forward.4} parent=5 // pred_region
      // Predicated region
      $region17: #{attention_forward.4} parent=15 // pred_check
        %p78 = pneg %p27
      $region18: #{attention_forward.4} parent=15 // pred_check_branch
        %80 = sbr.rel (%p78) target = $region20
      $region19: #{attention_forward.4} parent=15 // pred_region
        %p81 = scmp.lt.s32.totalorder %s7, 1
        %s82 = scalar_select %p81, %s7, 1
        %s83 = smul.addr %s82, 8
        %s84 = scalar_lea.vmem %s0, %s83
      $region20: #{attention_forward.4} parent=15 // pred_fallthru
        _
    $region16: #{attention_forward.4} parent=5 // pred_fallthru
      _
    %p85 = scmp.le.s32.totalorder 1, %s7
    %p86 = scmp.lt.s32.totalorder %s7, 3
    %p87 = pnand %p85, %p86
    %p88 = pneg %p87
    // Predicated region
    $region21: #{attention_forward.4} parent=5 // pred_check
      _
    $region22: #{attention_forward.4} parent=5 // pred_check_branch
      %90 = sbr.rel (%p87) target = $region24
    $region23: #{attention_forward.4} parent=5 // pred_region
      %s91 = ssub.s32 %s7, 1
      %p92 = scmp.lt.s32.totalorder %s12, 1
      %s93 = scalar_select %p92, %s12, 1
      %s94 = smul.addr %s93, 8
      %s95 = scalar_lea.vmem %s0, %s94
      %p96 = pneg %p33
      %p97 = pneg %p30
      %p98 = pneg %p59
      %p99 = pneg %p56
      %p100 = scmp.lt.s32.totalorder %s12, 1
      %s101 = scalar_select %p100, %s12, 1
      %s102 = smul.addr %s101, 8
      %s103 = scalar_lea.vmem %s1, %s102
      %p104 = scmp.lt.s32.totalorder %s12, 1
      %s105 = scalar_select %p104, %s12, 1
      %s106 = smul.addr %s105, 8
      %s107 = scalar_lea.vmem %s0, %s106
      %p108 = scmp.lt.s32.totalorder %s12, 1
      %s109 = scalar_select %p108, %s12, 1
      %s110 = smul.addr %s109, 8
      %s111 = scalar_lea.vmem %s1, %s110
      %v112 = vld [vmem:[%s107] sm:$0xff]
      %v113 = vmul.f32 %v112, 0.35355338
      %115 = vrot.lane.b32.xlu0 %v112, 96
      %v116 = vpop.permute.xlu0 %115
      %vm117 = vcmask 64512
      %v119 = vsel %vm117, %v113, 0
      %v121 = vsel %vm117, %v116, 0
      %123 = vmatpush.xpose.msra.mxu0 0.0
      %124 = vmatpush.xpose.msra.mxu0 0.0
      %125 = vmatpush.xpose.msra.mxu0 0.0
      %126 = vmatpush.xpose.msra.mxu0 0.0
      %127 = vmatpush.xpose.msra.mxu0 0.0
      %128 = vmatpush.xpose.msra.mxu0 0.0
      %129 = vmatpush.xpose.msra.mxu0 0.0
      %130 = vmatpush.xpose.msra.mxu0 0.0
      %131 = vmatpush.xpose.msra.mxu0 0.0
      %132 = vmatpush.xpose.msra.mxu0 0.0
      %133 = vmatpush.xpose.msra.mxu0 0.0
      %134 = vmatpush.xpose.msra.mxu0 0.0
      %135 = vmatpush.xpose.msra.mxu0 0.0
      %136 = vmatpush.xpose.msra.mxu0 0.0
      %137 = vmatpush.xpose.msra.mxu0 0.0
      %138 = vmatpush.xpose.msra.mxu0 %v121
      %139 = vmatmul.f32.gmra.mxu0 %v119
      %v140 = vpop.f32.mrf.mxu0
      %v141 = vadd.f32 0.0, %v140
      %142 = vdwg.mxu0
      %v143 = vsel %vm117, %v141, -inf
      %144 = vmax.xlane.f32.xlu0 %v143
      %v145 = vpop.xlane.xlu0 %144
      %v146 = vsub.f32 %v141, %v145
      %v147 = vmul.f32 %v146, 1.442695
      %v148 = vpow.pop %v147
      %v149 = vsel %vm117, %v148, 0.0
      %150 = vadd.xlane.f32.xlu0 %v149
      %v151 = vpop.xlane.xlu0 %150
      %v152 = vrcp.pop %v151
      %v153 = vmul.f32 %v151, %v152
      %v154 = vsub.f32 1.0, %v153
      %v155 = vmul.f32 %v152, %v154
      %v156 = vadd.f32 %v152, %v155
      %vm157 = vweird.f32 %v151
      %vm158 = vweird.f32 %v152
      %vm159 = vmor %vm157, %vm158
      %v160 = vsel %vm159, %v152, %v156
      %v161 = vand.u32 2147483647, %v151
      %vm162 = vcmp.eq.f32.partialorder %v161, 8.507059e+37
      %v163 = vand.u32 %v151, 2147483648
      %v164 = vor.u32 1.1754944e-38, %v163
      %v165 = vsel %vm162, %v164, %v160
      %v166 = vmul.f32 %v148, %v165
      %167 = vrot.lane.b32.xlu0 %v112, 64
      %v168 = vpop.permute.xlu0 %167
      %v171 = vsel %vm117, %v166, 0
      %173 = vmatpush.msra.mxu0 0.0
      %174 = vmatpush.msra.mxu0 0.0
      %175 = vmatpush.msra.mxu0 0.0
      %176 = vmatpush.msra.mxu0 0.0
      %177 = vmatpush.msra.mxu0 0.0
      %178 = vmatpush.msra.mxu0 0.0
      %179 = vmatpush.msra.mxu0 0.0
      %180 = vmatpush.msra.mxu0 0.0
      %181 = vmatpush.msra.mxu0 0.0
      %182 = vmatpush.msra.mxu0 0.0
      %183 = vmatpush.msra.mxu0 0.0
      %184 = vmatpush.msra.mxu0 0.0
      %185 = vmatpush.msra.mxu0 0.0
      %186 = vmatpush.msra.mxu0 0.0
      %187 = vmatpush.msra.mxu0 0.0
      %188 = vmatpush.msra.mxu0 %v168
      %189 = vmatmul.f32.gmra.mxu0 %v171
      %v190 = vpop.f32.mrf.mxu0
      %v191 = vadd.f32 0.0, %v190
      %192 = vdwg.mxu0
      %193 = vst.msk [vmem:[%s111] sm:$0xff] %vm117, %v191
      %194 = vrot.lane.b32.xlu0 %v113, 120
      %v195 = vpop.permute.xlu0 %194
      %196 = vrot.lane.b32.xlu0 %v112, 88
      %v197 = vpop.permute.xlu0 %196
      %v198 = vsel %vm117, %v195, 0
      %v200 = vsel %vm117, %v197, 0
      %202 = vmatpush.xpose.msra.mxu0 0.0
      %203 = vmatpush.xpose.msra.mxu0 0.0
      %204 = vmatpush.xpose.msra.mxu0 0.0
      %205 = vmatpush.xpose.msra.mxu0 0.0
      %206 = vmatpush.xpose.msra.mxu0 0.0
      %207 = vmatpush.xpose.msra.mxu0 0.0
      %208 = vmatpush.xpose.msra.mxu0 0.0
      %209 = vmatpush.xpose.msra.mxu0 0.0
      %210 = vmatpush.xpose.msra.mxu0 0.0
      %211 = vmatpush.xpose.msra.mxu0 0.0
      %212 = vmatpush.xpose.msra.mxu0 0.0
      %213 = vmatpush.xpose.msra.mxu0 0.0
      %214 = vmatpush.xpose.msra.mxu0 0.0
      %215 = vmatpush.xpose.msra.mxu0 0.0
      %216 = vmatpush.xpose.msra.mxu0 0.0
      %217 = vmatpush.xpose.msra.mxu0 %v200
      %218 = vmatmul.f32.gmra.mxu0 %v198
      %v219 = vpop.f32.mrf.mxu0
      %v220 = vadd.f32 0.0, %v219
      %221 = vdwg.mxu0
      %v222 = vsel %vm117, %v220, -inf
      %223 = vmax.xlane.f32.xlu0 %v222
      %v224 = vpop.xlane.xlu0 %223
      %v225 = vsub.f32 %v220, %v224
      %v226 = vmul.f32 %v225, 1.442695
      %v227 = vpow.pop %v226
      %v228 = vsel %vm117, %v227, 0.0
      %229 = vadd.xlane.f32.xlu0 %v228
      %v230 = vpop.xlane.xlu0 %229
      %v231 = vrcp.pop %v230
      %v232 = vmul.f32 %v230, %v231
      %v233 = vsub.f32 1.0, %v232
      %v234 = vmul.f32 %v231, %v233
      %v235 = vadd.f32 %v231, %v234
      %vm236 = vweird.f32 %v230
      %vm237 = vweird.f32 %v231
      %vm238 = vmor %vm236, %vm237
      %v239 = vsel %vm238, %v231, %v235
      %v240 = vand.u32 2147483647, %v230
      %vm241 = vcmp.eq.f32.partialorder %v240, 8.507059e+37
      %v242 = vand.u32 %v230, 2147483648
      %v243 = vor.u32 1.1754944e-38, %v242
      %v244 = vsel %vm241, %v243, %v239
      %v245 = vmul.f32 %v227, %v244
      %246 = vrot.lane.b32.xlu0 %v112, 56
      %v247 = vpop.permute.xlu0 %246
      %v250 = vsel %vm117, %v245, 0
      %252 = vmatpush.msra.mxu0 0.0
      %253 = vmatpush.msra.mxu0 0.0
      %254 = vmatpush.msra.mxu0 0.0
      %255 = vmatpush.msra.mxu0 0.0
      %256 = vmatpush.msra.mxu0 0.0
      %257 = vmatpush.msra.mxu0 0.0
      %258 = vmatpush.msra.mxu0 0.0
      %259 = vmatpush.msra.mxu0 0.0
      %260 = vmatpush.msra.mxu0 0.0
      %261 = vmatpush.msra.mxu0 0.0
      %262 = vmatpush.msra.mxu0 0.0
      %263 = vmatpush.msra.mxu0 0.0
      %264 = vmatpush.msra.mxu0 0.0
      %265 = vmatpush.msra.mxu0 0.0
      %266 = vmatpush.msra.mxu0 0.0
      %267 = vmatpush.msra.mxu0 %v247
      %268 = vmatmul.f32.gmra.mxu0 %v250
      %v269 = vpop.f32.mrf.mxu0
      %v270 = vadd.f32 0.0, %v269
      %271 = vdwg.mxu0
      %273 = vrot.lane.b32.xlu0 %v270, 8
      %v274 = vpop.permute.xlu0 %273
      %vm276 = vcmask 130112
      %277 = vst.msk [vmem:[%s111] sm:$0xff] %vm276, %v274
      %278 = vrot.lane.b32.xlu0 %v113, 112
      %v279 = vpop.permute.xlu0 %278
      %280 = vrot.lane.b32.xlu0 %v112, 80
      %v281 = vpop.permute.xlu0 %280
      %v282 = vsel %vm117, %v279, 0
      %v284 = vsel %vm117, %v281, 0
      %286 = vmatpush.xpose.msra.mxu0 0.0
      %287 = vmatpush.xpose.msra.mxu0 0.0
      %288 = vmatpush.xpose.msra.mxu0 0.0
      %289 = vmatpush.xpose.msra.mxu0 0.0
      %290 = vmatpush.xpose.msra.mxu0 0.0
      %291 = vmatpush.xpose.msra.mxu0 0.0
      %292 = vmatpush.xpose.msra.mxu0 0.0
      %293 = vmatpush.xpose.msra.mxu0 0.0
      %294 = vmatpush.xpose.msra.mxu0 0.0
      %295 = vmatpush.xpose.msra.mxu0 0.0
      %296 = vmatpush.xpose.msra.mxu0 0.0
      %297 = vmatpush.xpose.msra.mxu0 0.0
      %298 = vmatpush.xpose.msra.mxu0 0.0
      %299 = vmatpush.xpose.msra.mxu0 0.0
      %300 = vmatpush.xpose.msra.mxu0 0.0
      %301 = vmatpush.xpose.msra.mxu0 %v284
      %302 = vmatmul.f32.gmra.mxu0 %v282
      %v303 = vpop.f32.mrf.mxu0
      %v304 = vadd.f32 0.0, %v303
      %305 = vdwg.mxu0
      %v306 = vsel %vm117, %v304, -inf
      %307 = vmax.xlane.f32.xlu0 %v306
      %v308 = vpop.xlane.xlu0 %307
      %v309 = vsub.f32 %v304, %v308
      %v310 = vmul.f32 %v309, 1.442695
      %v311 = vpow.pop %v310
      %v312 = vsel %vm117, %v311, 0.0
      %313 = vadd.xlane.f32.xlu0 %v312
      %v314 = vpop.xlane.xlu0 %313
      %v315 = vrcp.pop %v314
      %v316 = vmul.f32 %v314, %v315
      %v317 = vsub.f32 1.0, %v316
      %v318 = vmul.f32 %v315, %v317
      %v319 = vadd.f32 %v315, %v318
      %vm320 = vweird.f32 %v314
      %vm321 = vweird.f32 %v315
      %vm322 = vmor %vm320, %vm321
      %v323 = vsel %vm322, %v315, %v319
      %v324 = vand.u32 2147483647, %v314
      %vm325 = vcmp.eq.f32.partialorder %v324, 8.507059e+37
      %v326 = vand.u32 %v314, 2147483648
      %v327 = vor.u32 1.1754944e-38, %v326
      %v328 = vsel %vm325, %v327, %v323
      %v329 = vmul.f32 %v311, %v328
      %330 = vrot.lane.b32.xlu0 %v112, 48
      %v331 = vpop.permute.xlu0 %330
      %v334 = vsel %vm117, %v329, 0
      %336 = vmatpush.msra.mxu0 0.0
      %337 = vmatpush.msra.mxu0 0.0
      %338 = vmatpush.msra.mxu0 0.0
      %339 = vmatpush.msra.mxu0 0.0
      %340 = vmatpush.msra.mxu0 0.0
      %341 = vmatpush.msra.mxu0 0.0
      %342 = vmatpush.msra.mxu0 0.0
      %343 = vmatpush.msra.mxu0 0.0
      %344 = vmatpush.msra.mxu0 0.0
      %345 = vmatpush.msra.mxu0 0.0
      %346 = vmatpush.msra.mxu0 0.0
      %347 = vmatpush.msra.mxu0 0.0
      %348 = vmatpush.msra.mxu0 0.0
      %349 = vmatpush.msra.mxu0 0.0
      %350 = vmatpush.msra.mxu0 0.0
      %351 = vmatpush.msra.mxu0 %v331
      %352 = vmatmul.f32.gmra.mxu0 %v334
      %v353 = vpop.f32.mrf.mxu0
      %v354 = vadd.f32 0.0, %v353
      %355 = vdwg.mxu0
      %357 = vrot.lane.b32.xlu0 %v354, 16
      %v358 = vpop.permute.xlu0 %357
      %vm360 = vcmask 195712
      %361 = vst.msk [vmem:[%s111] sm:$0xff] %vm360, %v358
      %362 = vrot.lane.b32.xlu0 %v113, 104
      %v363 = vpop.permute.xlu0 %362
      %364 = vrot.lane.b32.xlu0 %v112, 72
      %v365 = vpop.permute.xlu0 %364
      %v366 = vsel %vm117, %v363, 0
      %v368 = vsel %vm117, %v365, 0
      %370 = vmatpush.xpose.msra.mxu0 0.0
      %371 = vmatpush.xpose.msra.mxu0 0.0
      %372 = vmatpush.xpose.msra.mxu0 0.0
      %373 = vmatpush.xpose.msra.mxu0 0.0
      %374 = vmatpush.xpose.msra.mxu0 0.0
      %375 = vmatpush.xpose.msra.mxu0 0.0
      %376 = vmatpush.xpose.msra.mxu0 0.0
      %377 = vmatpush.xpose.msra.mxu0 0.0
      %378 = vmatpush.xpose.msra.mxu0 0.0
      %379 = vmatpush.xpose.msra.mxu0 0.0
      %380 = vmatpush.xpose.msra.mxu0 0.0
      %381 = vmatpush.xpose.msra.mxu0 0.0
      %382 = vmatpush.xpose.msra.mxu0 0.0
      %383 = vmatpush.xpose.msra.mxu0 0.0
      %384 = vmatpush.xpose.msra.mxu0 0.0
      %385 = vmatpush.xpose.msra.mxu0 %v368
      %386 = vmatmul.f32.gmra.mxu0 %v366
      %v387 = vpop.f32.mrf.mxu0
      %v388 = vadd.f32 0.0, %v387
      %389 = vdwg.mxu0
      %v390 = vsel %vm117, %v388, -inf
      %391 = vmax.xlane.f32.xlu0 %v390
      %v392 = vpop.xlane.xlu0 %391
      %v393 = vsub.f32 %v388, %v392
      %v394 = vmul.f32 %v393, 1.442695
      %v395 = vpow.pop %v394
      %v396 = vsel %vm117, %v395, 0.0
      %397 = vadd.xlane.f32.xlu0 %v396
      %v398 = vpop.xlane.xlu0 %397
      %v399 = vrcp.pop %v398
      %v400 = vmul.f32 %v398, %v399
      %v401 = vsub.f32 1.0, %v400
      %v402 = vmul.f32 %v399, %v401
      %v403 = vadd.f32 %v399, %v402
      %vm404 = vweird.f32 %v398
      %vm405 = vweird.f32 %v399
      %vm406 = vmor %vm404, %vm405
      %v407 = vsel %vm406, %v399, %v403
      %v408 = vand.u32 2147483647, %v398
      %vm409 = vcmp.eq.f32.partialorder %v408, 8.507059e+37
      %v410 = vand.u32 %v398, 2147483648
      %v411 = vor.u32 1.1754944e-38, %v410
      %v412 = vsel %vm409, %v411, %v407
      %v413 = vmul.f32 %v395, %v412
      %414 = vrot.lane.b32.xlu0 %v112, 40
      %v415 = vpop.permute.xlu0 %414
      %v418 = vsel %vm117, %v413, 0
      %420 = vmatpush.msra.mxu0 0.0
      %421 = vmatpush.msra.mxu0 0.0
      %422 = vmatpush.msra.mxu0 0.0
      %423 = vmatpush.msra.mxu0 0.0
      %424 = vmatpush.msra.mxu0 0.0
      %425 = vmatpush.msra.mxu0 0.0
      %426 = vmatpush.msra.mxu0 0.0
      %427 = vmatpush.msra.mxu0 0.0
      %428 = vmatpush.msra.mxu0 0.0
      %429 = vmatpush.msra.mxu0 0.0
      %430 = vmatpush.msra.mxu0 0.0
      %431 = vmatpush.msra.mxu0 0.0
      %432 = vmatpush.msra.mxu0 0.0
      %433 = vmatpush.msra.mxu0 0.0
      %434 = vmatpush.msra.mxu0 0.0
      %435 = vmatpush.msra.mxu0 %v415
      %436 = vmatmul.f32.gmra.mxu0 %v418
      %v437 = vpop.f32.mrf.mxu0
      %v438 = vadd.f32 0.0, %v437
      %439 = vdwg.mxu0
      %441 = vrot.lane.b32.xlu0 %v438, 24
      %v442 = vpop.permute.xlu0 %441
      %vm444 = vcmask 261312
      %445 = vst.msk [vmem:[%s111] sm:$0xff] %vm444, %v442
      %p446 = scmp.lt.s32.totalorder %s12, 1
      %s447 = scalar_select %p446, %s12, 1
      %s448 = smul.addr %s447, 8
      %s449 = scalar_lea.vmem %s1, %s448
      // Predicated region
      $region25: #{attention_forward.4} parent=23 // pred_check
        %p450 = pneg %p56
      $region26: #{attention_forward.4} parent=23 // pred_check_branch
        %452 = sbr.rel (%p450) target = $region28
      $region27: #{attention_forward.4} parent=23 // pred_region
        _
      $region28: #{attention_forward.4} parent=23 // pred_fallthru
        _
    $region24: #{attention_forward.4} parent=5 // pred_fallthru
      _
    %p453 = scmp.le.s32.totalorder 2, %s7
    // Predicated region
    $region29: #{attention_forward.4} parent=5 // pred_check
      %p454 = pneg %p453
    $region30: #{attention_forward.4} parent=5 // pred_check_branch
      %456 = sbr.rel (%p454) target = $region32
    $region31: #{attention_forward.4} parent=5 // pred_region
      %s457 = ssub.s32 %s7, 2
      // Predicated region
      $region33: #{attention_forward.4} parent=31 // pred_check
        %p458 = pneg %p62
      $region34: #{attention_forward.4} parent=31 // pred_check_branch
        %460 = sbr.rel (%p458) target = $region36
      $region35: #{attention_forward.4} parent=31 // pred_region
        %p461 = scmp.lt.s32.totalorder %s13, 1
        %s462 = scalar_select %p461, %s13, 1
        %s463 = smul.addr %s462, 8
        %s464 = scalar_lea.vmem %s1, %s463
      $region36: #{attention_forward.4} parent=31 // pred_fallthru
        _
    $region32: #{attention_forward.4} parent=5 // pred_fallthru
      _
  $region6: #{attention_forward.4} parent=0 // loop_footer
    %s11 = sadd.s32 1, %s7
  $region7: #{attention_forward.4} parent=0 // loop_footer_branch
    %6 = sbr.rel target = $region3
  $region8: #{attention_forward.4} parent=0 // loop_exit
    _

// kernel: attention_forward.3
$region0: #{attention_forward.3}
  #allocation0 [shape = 'u32[]', space=smem, size = 0x4, offset = 0x4, fixed_abs, tag = 'smem constant byte address 0x4 - core index']
  #allocation1 [shape = 'u32[72,128]{1,0:T(1,128)}', space=vmem, size = 0x9000, scoped, tag = 'internal scratch']
  #allocation2 [shape = 'f32[16,96]{1,0:T(8,128)}', space=vmem, size = 0x2000, scoped, tag = 'scratch operand']
  %s0 = inlined_call_operand.hbm [shape: f32[16,32], index: 0, kind: input, shape index: {}]
  %s1 = inlined_call_operand.hbm [shape: f32[32,96], index: 1, kind: input, shape index: {}]
  %s2 = inlined_call_operand.hbm [shape: f32[1,96], index: 2, kind: input, shape index: {}]
  %s3 = inlined_call_operand.vmem [shape: f32[16,96], index: 3, kind: output, shape index: {}]
  %s4 = sld [smem:[#allocation0]]
  $region42: #{attention_forward.3} parent=0
    _
  %s6 = ssub.s32 1, %s4
  %s7 = scalar_select 0, %s6, %s4
  $region1: #{attention_forward.3} parent=0
    #allocation3 [shape = 'u8[8192]{0}', space=vmem, size = 0x2000, scoped, tag = 'input window, operand 0, single buffered']
    #allocation4 [shape = 's32[1]{0}', space=sflag, size = 0x4, scoped, tag = 'scoped memory for attention_forward.3']
    #allocation5 [shape = 'u8[16384]{0}', space=vmem, size = 0x4000, scoped, tag = 'input window, operand 1, single buffered']
    #allocation6 [shape = 's32[1]{0}', space=sflag, size = 0x4, scoped, tag = 'scoped memory for attention_forward.3']
    #allocation7 [shape = 'u8[512]{0}', space=vmem, size = 0x400, scoped, tag = 'input window, operand 2, single buffered']
    %8 = vsyncpa [#allocation4], 0
    %9 = vsyncpa [#allocation6], 0
    // Predicated region
    $region2: #{attention_forward.3} parent=1 // pred_check
      _
    $region3: #{attention_forward.3} parent=1 // pred_check_branch
      %11 = sbr.rel (0) target = $region5
    $region4: #{attention_forward.3} parent=1 // pred_region
      %13 = vsyncadd [#allocation4], 0
      %s14 = sshll.u32 %s0, 4
      %s15 = int_to_ptr.hbm [resolvable:$true] %s14
      %s16 = sshll.u32 [#allocation3], 4
      %s17 = int_to_ptr.vmem [resolvable:$true] %s16
      %22 = dma.hbm_to_vmem [thread:$0]  %s15, 256, %s17, [#allocation4], 128, 128, 8
    $region5: #{attention_forward.3} parent=1 // pred_fallthru
      _
    // Predicated region
    $region6: #{attention_forward.3} parent=1 // pred_check
      _
    $region7: #{attention_forward.3} parent=1 // pred_check_branch
      %24 = sbr.rel (0) target = $region9
    $region8: #{attention_forward.3} parent=1 // pred_region
      %26 = vsyncadd [#allocation6], 0
      %s27 = sshll.u32 %s1, 4
      %s28 = int_to_ptr.hbm [resolvable:$true] %s27
      %s29 = sshll.u32 [#allocation5], 4
      %s30 = int_to_ptr.vmem [resolvable:$true] %s29
      %35 = dma.hbm_to_vmem [thread:$0]  %s28, 512, %s30, [#allocation6], 128, 128, 8
    $region9: #{attention_forward.3} parent=1 // pred_fallthru
      _
    // Predicated region
    $region10: #{attention_forward.3} parent=1 // pred_check
      _
    $region11: #{attention_forward.3} parent=1 // pred_check_branch
      %37 = sbr.rel (0) target = $region13
    $region12: #{attention_forward.3} parent=1 // pred_region
      %39 = vsyncadd [#allocation6], 0
      %s41 = sshll.u32 %s2, 4
      %s42 = int_to_ptr.hbm [resolvable:$true] %s41
      %s43 = sshll.u32 [#allocation7], 4
      %s44 = int_to_ptr.vmem [resolvable:$true] %s43
      %46 = dma.hbm_to_vmem [thread:$0]  %s42, 16, %s44, [#allocation6]
    $region13: #{attention_forward.3} parent=1 // pred_fallthru
      _
    // Predicated region
    $region14: #{attention_forward.3} parent=1 // pred_check
      _
    $region15: #{attention_forward.3} parent=1 // pred_check_branch
      %48 = sbr.rel (0) target = $region17
    $region16: #{attention_forward.3} parent=1 // pred_region
      %50 = dma.done [#allocation4], 256
    $region17: #{attention_forward.3} parent=1 // pred_fallthru
      _
    // Predicated region
    $region18: #{attention_forward.3} parent=1 // pred_check
      _
    $region19: #{attention_forward.3} parent=1 // pred_check_branch
      %52 = sbr.rel (0) target = $region21
    $region20: #{attention_forward.3} parent=1 // pred_region
      %54 = dma.done [#allocation6], 512
    $region21: #{attention_forward.3} parent=1 // pred_fallthru
      _
    // Predicated region
    $region22: #{attention_forward.3} parent=1 // pred_check
      _
    $region23: #{attention_forward.3} parent=1 // pred_check_branch
      %56 = sbr.rel (0) target = $region25
    $region24: #{attention_forward.3} parent=1 // pred_region
      %58 = dma.done [#allocation6], 16
    $region25: #{attention_forward.3} parent=1 // pred_fallthru
      _
    %p59 = scmp.eq.s32.totalorder 0, 0
    // Predicated region
    $region26: #{attention_forward.3} parent=1 // pred_check
      %p60 = pneg %p59
    $region27: #{attention_forward.3} parent=1 // pred_check_branch
      %62 = sbr.rel (%p60) target = $region29
    $region28: #{attention_forward.3} parent=1 // pred_region
      %vm63 = vcmask 785408
      %64 = vst.msk [vmem:[#allocation2] sm:$0xff] %vm63, 0.0
      %65 = vst.msk [vmem:[#allocation2 + $0x8] sm:$0xff] %vm63, 0.0
    $region29: #{attention_forward.3} parent=1 // pred_fallthru
      _
    %v66 = vld [vmem:[#allocation2] sm:$0xff]
    %v67 = vld [vmem:[#allocation2 + $0x8] sm:$0xff]
    %v68 = vld [vmem:[#allocation3] sm:$0xff]
    %v69 = vld [vmem:[#allocation3 + $0x8] sm:$0xff]
    %v70 = vld [vmem:[#allocation5] sm:$0xff]
    %v71 = vld [vmem:[#allocation5 + $0x8] sm:$0xff]
    %v72 = vld [vmem:[#allocation5 + $0x10] sm:$0xff]
    %v73 = vld [vmem:[#allocation5 + $0x18] sm:$0xff]
    %vm74 = vcmask 261120
    %v76 = vsel %vm74, %v68, 0
    %v79 = vsel %vm74, %v69, 0
    %81 = vmatpush.msra.mxu0 0.0
    %82 = vmatpush.msra.mxu0 0.0
    %83 = vmatpush.msra.mxu0 0.0
    %84 = vmatpush.msra.mxu0 0.0
    %85 = vmatpush.msra.mxu0 0.0
    %86 = vmatpush.msra.mxu0 0.0
    %87 = vmatpush.msra.mxu0 0.0
    %88 = vmatpush.msra.mxu0 0.0
    %89 = vmatpush.msra.mxu0 0.0
    %90 = vmatpush.msra.mxu0 0.0
    %91 = vmatpush.msra.mxu0 0.0
    %92 = vmatpush.msra.mxu0 0.0
    %93 = vmatpush.msra.mxu0 %v73
    %94 = vmatpush.msra.mxu0 %v72
    %95 = vmatpush.msra.mxu0 %v71
    %96 = vmatpush.msra.mxu0 %v70
    %97 = vmatmul.f32.gmra.mxu0 %v76
    %v98 = vpop.f32.mrf.mxu0
    %v99 = vadd.f32 0.0, %v98
    %100 = vmatmul.f32.gmra.mxu0 %v79
    %v101 = vpop.f32.mrf.mxu0
    %v102 = vadd.f32 0.0, %v101
    %103 = vdwg.mxu0
    %v104 = vadd.f32 %v66, %v99
    %v105 = vadd.f32 %v67, %v102
    %vm106 = vcmask 785408
    %107 = vst.msk [vmem:[#allocation2] sm:$0xff] %vm106, %v104
    %108 = vst.msk [vmem:[#allocation2 + $0x8] sm:$0xff] %vm106, %v105
    // Predicated region
    $region30: #{attention_forward.3} parent=1 // pred_check
      %p109 = pneg %p59
    $region31: #{attention_forward.3} parent=1 // pred_check_branch
      %111 = sbr.rel (%p109) target = $region33
    $region32: #{attention_forward.3} parent=1 // pred_region
      %v112 = vld [vmem:[#allocation2] sm:$0xff]
      %v113 = vld [vmem:[#allocation2 + $0x8] sm:$0xff]
      %v114 = vld [vmem:[#allocation7] sm:$0x1]
      %v116 = vperm.slane %v114, 0
      %v118 = vadd.f32 %v112, %v116
      %v119 = vadd.f32 %v113, %v116
      %120 = vst.msk [vmem:[%s3] sm:$0xff] %vm106, %v118
      %121 = vst.msk [vmem:[%s3 + $0x8] sm:$0xff] %vm106, %v119
    $region33: #{attention_forward.3} parent=1 // pred_fallthru
      _
    // Predicated region
    $region34: #{attention_forward.3} parent=1 // pred_check
      _
    $region35: #{attention_forward.3} parent=1 // pred_check_branch
      %123 = sbr.rel (0) target = $region37
    $region36: #{attention_forward.3} parent=1 // pred_region
      _
    $region37: #{attention_forward.3} parent=1 // pred_fallthru
      _
    // Predicated region
    $region38: #{attention_forward.3} parent=1 // pred_check
      _
    $region39: #{attention_forward.3} parent=1 // pred_check_branch
      %125 = sbr.rel (0) target = $region41
    $region40: #{attention_forward.3} parent=1 // pred_region
      _
    $region41: #{attention_forward.3} parent=1 // pred_fallthru
      _
    %126 = vsyncpa [#allocation4], 1
    %127 = vsyncpa [#allocation6], 1

// kernel: attention_forward.5
$region0: #{attention_forward.5}
  #allocation0 [shape = 'u32[]', space=smem, size = 0x4, offset = 0x4, fixed_abs, tag = 'smem constant byte address 0x4 - core index']
  #allocation1 [shape = 'u32[72,128]{1,0:T(1,128)}', space=vmem, size = 0x9000, scoped, tag = 'internal scratch']
  #allocation2 [shape = 'f32[16,32]{1,0:T(8,128)}', space=vmem, size = 0x2000, scoped, tag = 'scratch operand']
  %s0 = inlined_call_operand.vmem [shape: f32[16,32], index: 0, kind: input, shape index: {}]
  %s1 = inlined_call_operand.vmem [shape: f32[32,32], index: 1, kind: input, shape index: {}]
  %s2 = inlined_call_operand.vmem [shape: f32[1,32], index: 2, kind: input, shape index: {}]
  %s3 = inlined_call_operand.hbm [shape: f32[16,32], index: 3, kind: output, shape index: {}]
  %s4 = sld [smem:[#allocation0]]
  $region30: #{attention_forward.5} parent=0
    _
  %s6 = ssub.s32 1, %s4
  %s7 = scalar_select 0, %s6, %s4
  $region1: #{attention_forward.5} parent=0
    #allocation3 [shape = 'u8[8192]{0}', space=vmem, size = 0x2000, scoped, tag = 'output window, operand 0, single buffered']
    #allocation4 [shape = 's32[1]{0}', space=sflag, size = 0x4, scoped, tag = 'scoped memory for attention_forward.5']
    %8 = vsyncpa [#allocation4], 0
    // Predicated region
    $region2: #{attention_forward.5} parent=1 // pred_check
      _
    $region3: #{attention_forward.5} parent=1 // pred_check_branch
      %10 = sbr.rel (0) target = $region5
    $region4: #{attention_forward.5} parent=1 // pred_region
      _
    $region5: #{attention_forward.5} parent=1 // pred_fallthru
      _
    // Predicated region
    $region6: #{attention_forward.5} parent=1 // pred_check
      _
    $region7: #{attention_forward.5} parent=1 // pred_check_branch
      %12 = sbr.rel (0) target = $region9
    $region8: #{attention_forward.5} parent=1 // pred_region
      _
    $region9: #{attention_forward.5} parent=1 // pred_fallthru
      _
    // Predicated region
    $region10: #{attention_forward.5} parent=1 // pred_check
      _
    $region11: #{attention_forward.5} parent=1 // pred_check_branch
      %14 = sbr.rel (0) target = $region13
    $region12: #{attention_forward.5} parent=1 // pred_region
      _
    $region13: #{attention_forward.5} parent=1 // pred_fallthru
      _
    %p15 = scmp.eq.s32.totalorder 0, 0
    // Predicated region
    $region14: #{attention_forward.5} parent=1 // pred_check
      %p16 = pneg %p15
    $region15: #{attention_forward.5} parent=1 // pred_check_branch
      %18 = sbr.rel (%p16) target = $region17
    $region16: #{attention_forward.5} parent=1 // pred_region
      %vm19 = vcmask 261120
      %20 = vst.msk [vmem:[#allocation2] sm:$0xff] %vm19, 0.0
      %21 = vst.msk [vmem:[#allocation2 + $0x8] sm:$0xff] %vm19, 0.0
    $region17: #{attention_forward.5} parent=1 // pred_fallthru
      _
    %v22 = vld [vmem:[#allocation2] sm:$0xff]
    %v23 = vld [vmem:[#allocation2 + $0x8] sm:$0xff]
    %v24 = vld [vmem:[%s0] sm:$0xff]
    %v25 = vld [vmem:[%s0 + $0x8] sm:$0xff]
    %v26 = vld [vmem:[%s1] sm:$0xff]
    %v27 = vld [vmem:[%s1 + $0x8] sm:$0xff]
    %v28 = vld [vmem:[%s1 + $0x10] sm:$0xff]
    %v29 = vld [vmem:[%s1 + $0x18] sm:$0xff]
    %vm30 = vcmask 261120
    %v32 = vsel %vm30, %v24, 0
    %v35 = vsel %vm30, %v25, 0
    %37 = vmatpush.msra.mxu0 0.0
    %38 = vmatpush.msra.mxu0 0.0
    %39 = vmatpush.msra.mxu0 0.0
    %40 = vmatpush.msra.mxu0 0.0
    %41 = vmatpush.msra.mxu0 0.0
    %42 = vmatpush.msra.mxu0 0.0
    %43 = vmatpush.msra.mxu0 0.0
    %44 = vmatpush.msra.mxu0 0.0
    %45 = vmatpush.msra.mxu0 0.0
    %46 = vmatpush.msra.mxu0 0.0
    %47 = vmatpush.msra.mxu0 0.0
    %48 = vmatpush.msra.mxu0 0.0
    %49 = vmatpush.msra.mxu0 %v29
    %50 = vmatpush.msra.mxu0 %v28
    %51 = vmatpush.msra.mxu0 %v27
    %52 = vmatpush.msra.mxu0 %v26
    %53 = vmatmul.f32.gmra.mxu0 %v32
    %v54 = vpop.f32.mrf.mxu0
    %v55 = vadd.f32 0.0, %v54
    %56 = vmatmul.f32.gmra.mxu0 %v35
    %v57 = vpop.f32.mrf.mxu0
    %v58 = vadd.f32 0.0, %v57
    %59 = vdwg.mxu0
    %v60 = vadd.f32 %v22, %v55
    %v61 = vadd.f32 %v23, %v58
    %62 = vst.msk [vmem:[#allocation2] sm:$0xff] %vm30, %v60
    %63 = vst.msk [vmem:[#allocation2 + $0x8] sm:$0xff] %vm30, %v61
    // Predicated region
    $region18: #{attention_forward.5} parent=1 // pred_check
      %p64 = pneg %p15
    $region19: #{attention_forward.5} parent=1 // pred_check_branch
      %66 = sbr.rel (%p64) target = $region21
    $region20: #{attention_forward.5} parent=1 // pred_region
      %v67 = vld [vmem:[#allocation2] sm:$0xff]
      %v68 = vld [vmem:[#allocation2 + $0x8] sm:$0xff]
      %v69 = vld [vmem:[%s2] sm:$0x1]
      %v71 = vperm.slane %v69, 0
      %v73 = vadd.f32 %v67, %v71
      %v74 = vadd.f32 %v68, %v71
      %75 = vst.msk [vmem:[#allocation3] sm:$0xff] %vm30, %v73
      %76 = vst.msk [vmem:[#allocation3 + $0x8] sm:$0xff] %vm30, %v74
    $region21: #{attention_forward.5} parent=1 // pred_fallthru
      _
    // Predicated region
    $region22: #{attention_forward.5} parent=1 // pred_check
      _
    $region23: #{attention_forward.5} parent=1 // pred_check_branch
      %78 = sbr.rel (0) target = $region25
    $region24: #{attention_forward.5} parent=1 // pred_region
      %80 = vsyncadd [#allocation4], 0
      %s81 = sshll.u32 [#allocation3], 4
      %s82 = int_to_ptr.vmem [resolvable:$true] %s81
      %s83 = sshll.u32 %s3, 4
      %s84 = int_to_ptr.hbm [resolvable:$true] %s83
      %89 = dma.vmem_to_hbm [thread:$0]  %s82, 256, %s84, [#allocation4], 128, 128, 8
    $region25: #{attention_forward.5} parent=1 // pred_fallthru
      _
    // Predicated region
    $region26: #{attention_forward.5} parent=1 // pred_check
      _
    $region27: #{attention_forward.5} parent=1 // pred_check_branch
      %91 = sbr.rel (0) target = $region29
    $region28: #{attention_forward.5} parent=1 // pred_region
      %93 = dma.done [#allocation4], 256
    $region29: #{attention_forward.5} parent=1 // pred_fallthru
      _
    %94 = vsyncpa [#allocation4], 1

</llo_original>
